<compile_context>
chip_gen: v7x
topology: tpu7x:2x2x1
jax: 0.10.0
libtpu: 0.0.40
codegen_flags: <defaults>
</compile_context>

<pallas_src>
import jax
import jax.numpy as jnp
from jax import lax
from jax.experimental import pallas as pl
from jax.experimental.pallas import tpu as pltpu


# ---------------- hoisted LSTM input projection (both directions at once) ----
def _input_proj_kernel(x_ref, w_ref, b_ref, o_ref):
    acc = jnp.dot(x_ref[...].astype(jnp.bfloat16), w_ref[...],
                  preferred_element_type=jnp.float32) + b_ref[...]
    o_ref[...] = acc.astype(jnp.bfloat16)


def input_projection(x_rows, wih_bf16, bias):
    """x_rows (R, E), wih (E, 8H) bf16 ([:, :4H]=fwd, [:, 4H:]=bwd),
    bias (1, 8H) -> (R, 8H) bf16."""
    R, E = x_rows.shape
    G2 = wih_bf16.shape[-1]
    RT = R if R <= 512 else 512
    return pl.pallas_call(
        _input_proj_kernel,
        out_shape=jax.ShapeDtypeStruct((R, G2), jnp.bfloat16),
        grid_spec=pltpu.PrefetchScalarGridSpec(
            num_scalar_prefetch=0,
            grid=(pl.cdiv(R, RT),),
            in_specs=[
                pl.BlockSpec((RT, E), lambda r: (r, 0)),
                pl.BlockSpec((E, G2), lambda r: (0, 0)),
                pl.BlockSpec((1, G2), lambda r: (0, 0)),
            ],
            out_specs=pl.BlockSpec((RT, G2), lambda r: (r, 0)),
        ),
        compiler_params=pltpu.CompilerParams(
            dimension_semantics=("parallel",),
            vmem_limit_bytes=32 * 1024 * 1024),
    )(x_rows, wih_bf16, bias)


# ---------------- direction-fused masked LSTM recurrence ---------------------
def _bilstm_recur_kernel(xw_ref, m_ref, whh_ref, out_ref):
    # xw_ref  (T, B, 8H)  bf16 precomputed x@W_ih + b, [:4H]=fwd, [4H:]=bwd
    # m_ref   (T, B, 1)   sequence mask
    # whh_ref (2, H, 4H)  bf16 recurrent weights (0=fwd, 1=bwd)
    # out_ref (T, B, 2H)  f32 output ([:H]=fwd, [H:]=bwd)
    T, B, _ = xw_ref.shape
    H = whh_ref.shape[1]
    G = 4 * H
    whh_f = whh_ref[0]
    whh_b = whh_ref[1]

    # TODO(synk): for production H (e.g. 300) pad H to a multiple of 128 so
    # the gate slices / half-width output stores are lane-aligned.
    def gate_update(gates, c):
        i_g = jax.nn.sigmoid(gates[:, 0:H])
        f_g = jax.nn.sigmoid(gates[:, H:2 * H])
        g_g = jnp.tanh(gates[:, 2 * H:3 * H])
        o_g = jax.nn.sigmoid(gates[:, 3 * H:4 * H])
        c_new = f_g * c + i_g * g_g
        h_new = o_g * jnp.tanh(c_new)
        return h_new, c_new

    def step(s, carry):
        h_f, c_f, h_b, c_b = carry
        tf = s
        tb = T - 1 - s
        # Both directions' recurrent matmuls are independent -> issued
        # back-to-back on the MXU within one serial step.
        g_f = (xw_ref[tf, :, 0:G].astype(jnp.float32)
               + jnp.dot(h_f.astype(jnp.bfloat16), whh_f,
                         preferred_element_type=jnp.float32))
        g_b = (xw_ref[tb, :, G:2 * G].astype(jnp.float32)
               + jnp.dot(h_b.astype(jnp.bfloat16), whh_b,
                         preferred_element_type=jnp.float32))
        hf_new, cf_new = gate_update(g_f, c_f)
        hb_new, cb_new = gate_update(g_b, c_b)
        m_f = m_ref[tf]                      # (B, 1)
        m_b = m_ref[tb]
        # packed-sequence semantics: frozen state + zero output at padded steps
        h_f = h_f + m_f * (hf_new - h_f)
        c_f = c_f + m_f * (cf_new - c_f)
        h_b = h_b + m_b * (hb_new - h_b)
        c_b = c_b + m_b * (cb_new - c_b)
        out_ref[tf, :, 0:H] = m_f * hf_new
        out_ref[tb, :, H:2 * H] = m_b * hb_new
        return (h_f, c_f, h_b, c_b)

    z = jnp.zeros((B, H), jnp.float32)
    lax.fori_loop(0, T, step, (z, z, z, z), unroll=2)


def recurrent_bilstm(xw_tbg, mask_tb1, whh_bf16):
    """xw (T, B, 8H) bf16, mask (T, B, 1), whh (2, H, 4H) bf16 -> (T, B, 2H)."""
    T, B, G2 = xw_tbg.shape
    H = whh_bf16.shape[1]
    # TODO(synk): for long sequences on v7x (64 MiB VMEM) stream (Tc, B, 8H)
    # time chunks of xw/out with pl.ANY + make_async_copy instead of holding
    # the whole slabs resident.
    return pl.pallas_call(
        _bilstm_recur_kernel,
        out_shape=jax.ShapeDtypeStruct((T, B, 2 * H), jnp.float32),
        grid_spec=pltpu.PrefetchScalarGridSpec(
            num_scalar_prefetch=0,
            grid=(1,),
            in_specs=[
                pl.BlockSpec((T, B, G2), lambda i: (0, 0, 0)),
                pl.BlockSpec((T, B, 1), lambda i: (0, 0, 0)),
                pl.BlockSpec((2, H, 4 * H), lambda i: (0, 0, 0)),
            ],
            out_specs=pl.BlockSpec((T, B, 2 * H), lambda i: (0, 0, 0)),
        ),
        compiler_params=pltpu.CompilerParams(
            dimension_semantics=("arbitrary",),
            vmem_limit_bytes=48 * 1024 * 1024),
    )(xw_tbg, mask_tb1, whh_bf16)


def bilstm_encode_tm(x_tbe, mask_tb1, p):
    """Time-major x (T,B,E), mask (T,B,1) -> (T,B,2H) bidirectional outputs."""
    T, B, E = x_tbe.shape
    H = p["whh"].shape[1]
    wih_bf = p["wih"].astype(jnp.bfloat16)
    whh_bf = p["whh"].astype(jnp.bfloat16)
    x_rows = x_tbe.reshape(T * B, E)
    xw = input_projection(x_rows, wih_bf, p["b"]).reshape(T, B, 8 * H)
    return recurrent_bilstm(xw, mask_tb1, whh_bf)


# ----------------------------- soft attention --------------------------------
def _attention_kernel(p_ref, h_ref, pmc_ref, pmr_ref, hmc_ref, hmr_ref,
                      ap_ref, ah_ref):
    P = p_ref[...].astype(jnp.bfloat16)       # (BB, Tp, D)
    Hy = h_ref[...].astype(jnp.bfloat16)      # (BB, Th, D)
    pm_col = pmc_ref[...]                     # (BB, Tp, 1)
    pm_row = pmr_ref[...]                     # (BB, 1, Tp)
    hm_col = hmc_ref[...]                     # (BB, Th, 1)
    hm_row = hmr_ref[...]                     # (BB, 1, Th)

    # Single score matmul; the transposed scores come from an XLU transpose
    # (different VLIW slot from the MXU) instead of a second matmul.
    sim = jnp.einsum('bpd,bhd->bph', P, Hy,
                     preferred_element_type=jnp.float32)        # (BB, Tp, Th)
    simT = jnp.swapaxes(sim, 1, 2)                              # (BB, Th, Tp)

    # Reference masked_softmax: softmax(mask * logits), no renormalization.
    def msoftmax(z):
        z = z - jnp.max(z, axis=-1, keepdims=True)
        e = jnp.exp(z)
        return e * pl.reciprocal(jnp.sum(e, axis=-1, keepdims=True), approx=True)

    pa = msoftmax(sim * hm_row)                                 # (BB, Tp, Th)
    ap_ref[...] = jnp.einsum('bph,bhd->bpd', pa.astype(jnp.bfloat16), Hy,
                             preferred_element_type=jnp.float32) * pm_col

    hb = msoftmax(simT * pm_row)                                # (BB, Th, Tp)
    ah_ref[...] = jnp.einsum('bhp,bpd->bhd', hb.astype(jnp.bfloat16), P,
                             preferred_element_type=jnp.float32) * hm_col


def soft_attention(P, Hyp, pmask, hmask):
    B, Tp, D = P.shape
    Th = Hyp.shape[1]
    BB = B if B <= 16 else 16
    return pl.pallas_call(
        _attention_kernel,
        out_shape=(jax.ShapeDtypeStruct((B, Tp, D), jnp.float32),
                   jax.ShapeDtypeStruct((B, Th, D), jnp.float32)),
        grid_spec=pltpu.PrefetchScalarGridSpec(
            num_scalar_prefetch=0,
            grid=(pl.cdiv(B, BB),),
            in_specs=[
                pl.BlockSpec((BB, Tp, D), lambda b: (b, 0, 0)),
                pl.BlockSpec((BB, Th, D), lambda b: (b, 0, 0)),
                pl.BlockSpec((BB, Tp, 1), lambda b: (b, 0, 0)),
                pl.BlockSpec((BB, 1, Tp), lambda b: (b, 0, 0)),
                pl.BlockSpec((BB, Th, 1), lambda b: (b, 0, 0)),
                pl.BlockSpec((BB, 1, Th), lambda b: (b, 0, 0)),
            ],
            out_specs=[
                pl.BlockSpec((BB, Tp, D), lambda b: (b, 0, 0)),
                pl.BlockSpec((BB, Th, D), lambda b: (b, 0, 0)),
            ],
        ),
        compiler_params=pltpu.CompilerParams(
            dimension_semantics=("parallel",),
            vmem_limit_bytes=32 * 1024 * 1024),
    )(P, Hyp, pmask[:, :, None], pmask[:, None, :],
      hmask[:, :, None], hmask[:, None, :])


# --------------------- enhancement + projection (fused) ----------------------
def _enhance_project_kernel(e_ref, a_ref, w_ref, b_ref, o_ref):
    e = e_ref[...]            # (RT, D) f32
    a = a_ref[...]            # (RT, D) f32
    D = e.shape[-1]
    w = w_ref[...]            # (4D, H) bf16
    acc = (jnp.dot(e.astype(jnp.bfloat16), w[0:D],
                   preferred_element_type=jnp.float32)
           + jnp.dot(a.astype(jnp.bfloat16), w[D:2 * D],
                     preferred_element_type=jnp.float32)
           + jnp.dot((e - a).astype(jnp.bfloat16), w[2 * D:3 * D],
                     preferred_element_type=jnp.float32)
           + jnp.dot((e * a).astype(jnp.bfloat16), w[3 * D:4 * D],
                     preferred_element_type=jnp.float32)
           + b_ref[...])
    o_ref[...] = acc.astype(jnp.bfloat16)


def enhance_and_project(enc, att, w_bf16, b):
    B, T, D = enc.shape
    Hh = w_bf16.shape[1]
    R = B * T
    RT = R if R <= 512 else 512
    out = pl.pallas_call(
        _enhance_project_kernel,
        out_shape=jax.ShapeDtypeStruct((R, Hh), jnp.bfloat16),
        grid_spec=pltpu.PrefetchScalarGridSpec(
            num_scalar_prefetch=0,
            grid=(pl.cdiv(R, RT),),
            in_specs=[
                pl.BlockSpec((RT, D), lambda r: (r, 0)),
                pl.BlockSpec((RT, D), lambda r: (r, 0)),
                pl.BlockSpec((4 * D, Hh), lambda r: (0, 0)),
                pl.BlockSpec((1, Hh), lambda r: (0, 0)),
            ],
            out_specs=pl.BlockSpec((RT, Hh), lambda r: (r, 0)),
        ),
        compiler_params=pltpu.CompilerParams(
            dimension_semantics=("parallel",),
            vmem_limit_bytes=32 * 1024 * 1024),
    )(enc.reshape(R, D), att.reshape(R, D), w_bf16, b)
    return out.reshape(B, T, Hh)


# --------------------- pooling + classifier head (fused) ---------------------
def _pool_classify_kernel(va_ref, vb_ref, pm_ref, hm_ref,
                          w1_ref, b1_ref, w2_ref, b2_ref, o_ref):
    va = va_ref[...]          # (BB, Tp, D2) f32
    vb = vb_ref[...]          # (BB, Th, D2) f32
    pm = pm_ref[...]          # (BB, Tp, 1)
    hm = hm_ref[...]          # (BB, Th, 1)
    D2 = va.shape[-1]

    a_avg = jnp.sum(va * pm, axis=1) * pl.reciprocal(jnp.sum(pm, axis=1),
                                                     approx=True)
    b_avg = jnp.sum(vb * hm, axis=1) * pl.reciprocal(jnp.sum(hm, axis=1),
                                                     approx=True)
    a_max = jnp.max(va * pm + (-10000000.0) * (1.0 - pm), axis=1)
    b_max = jnp.max(vb * hm + (-10000000.0) * (1.0 - hm), axis=1)

    w1 = w1_ref[...]          # (4*D2, H) bf16
    # TODO(synk): nn.Dropout layers are identity here (inference semantics).
    hdn = jnp.tanh(
        jnp.dot(a_avg.astype(jnp.bfloat16), w1[0:D2],
                preferred_element_type=jnp.float32)
        + jnp.dot(a_max.astype(jnp.bfloat16), w1[D2:2 * D2],
                  preferred_element_type=jnp.float32)
        + jnp.dot(b_avg.astype(jnp.bfloat16), w1[2 * D2:3 * D2],
                  preferred_element_type=jnp.float32)
        + jnp.dot(b_max.astype(jnp.bfloat16), w1[3 * D2:4 * D2],
                  preferred_element_type=jnp.float32)
        + b1_ref[...])
    o_ref[...] = (jnp.dot(hdn.astype(jnp.bfloat16), w2_ref[...],
                          preferred_element_type=jnp.float32) + b2_ref[...])


def pool_and_classify(va, vb, pmask, hmask, w1_bf16, b1, w2_bf16, b2):
    B, Tp, D2 = va.shape
    Th = vb.shape[1]
    Hh = w1_bf16.shape[1]
    L = w2_bf16.shape[1]
    BB = B if B <= 16 else 16
    return pl.pallas_call(
        _pool_classify_kernel,
        out_shape=jax.ShapeDtypeStruct((B, L), jnp.float32),
        grid_spec=pltpu.PrefetchScalarGridSpec(
            num_scalar_prefetch=0,
            grid=(pl.cdiv(B, BB),),
            in_specs=[
                pl.BlockSpec((BB, Tp, D2), lambda i: (i, 0, 0)),
                pl.BlockSpec((BB, Th, D2), lambda i: (i, 0, 0)),
                pl.BlockSpec((BB, Tp, 1), lambda i: (i, 0, 0)),
                pl.BlockSpec((BB, Th, 1), lambda i: (i, 0, 0)),
                pl.BlockSpec((4 * D2, Hh), lambda i: (0, 0)),
                pl.BlockSpec((1, Hh), lambda i: (0, 0)),
                pl.BlockSpec((Hh, L), lambda i: (0, 0)),
                pl.BlockSpec((1, L), lambda i: (0, 0)),
            ],
            out_specs=pl.BlockSpec((BB, L), lambda i: (i, 0)),
        ),
        compiler_params=pltpu.CompilerParams(
            dimension_semantics=("parallel",),
            vmem_limit_bytes=32 * 1024 * 1024),
    )(va, vb, pmask[:, :, None], hmask[:, :, None], w1_bf16, b1, w2_bf16, b2)


# ------------------------------- parameters ----------------------------------
def _uniform(key, shape, scale):
    return jax.random.uniform(key, shape, jnp.float32, -scale, scale)


def init_params(key, vocab_size, emb_dim, hidden, labels):
    ks = jax.random.split(key, 9)
    s = 1.0 / (hidden ** 0.5)
    s8 = 1.0 / ((8.0 * hidden) ** 0.5)

    def lstm_params(k, in_dim):
        k1, k2, k3 = jax.random.split(k, 3)
        # wih columns [0:4H]=forward, [4H:8H]=backward (stacked for one matmul)
        # TODO(synk): PyTorch LSTM has b_ih and b_hh; when porting real weights
        # feed b = b_ih + b_hh.
        return {
            "wih": _uniform(k1, (in_dim, 8 * hidden), s),
            "whh": _uniform(k2, (2, hidden, 4 * hidden), s),
            "b":   _uniform(k3, (1, 8 * hidden), s),
        }

    return {
        "embedding": jax.random.normal(ks[0], (vocab_size, emb_dim), jnp.float32),
        "enc": lstm_params(ks[1], emb_dim),
        "comp": lstm_params(ks[2], hidden),
        "proj_w": _uniform(ks[3], (8 * hidden, hidden), s8),
        "proj_b": _uniform(ks[4], (1, hidden), s8),
        "cls_w1": _uniform(ks[5], (8 * hidden, hidden), s8),
        "cls_b1": _uniform(ks[6], (1, hidden), s8),
        "cls_w2": _uniform(ks[7], (hidden, labels), s),
        "cls_b2": _uniform(ks[8], (1, labels), s),
    }


# ------------------------------ ESIM forward ----------------------------------
def esim_forward(params, premises, premises_lengths, hypotheses, hypotheses_lengths):
    B = premises.shape[0]
    # get_mask: trim to max length, mask token-id 0 (padding).
    # TODO(synk): int(.max()) host-syncs; reference masked_softmax semantics
    # (softmax over mask*logits) depend on the exact trimmed length, so length
    # bucketing would change numerics and is not applied here.
    tp = int(premises_lengths.max())
    th = int(hypotheses_lengths.max())
    tm = max(tp, th)

    def fit_time(tokens, width):
        cur = tokens.shape[1]
        if cur >= width:
            return tokens[:, :width]
        return jnp.pad(tokens, ((0, 0), (0, width - cur)))

    # Fuse premise & hypothesis along batch (padded to a common T) so each
    # bidirectional LSTM layer is a single kernel launch with 2x batch.
    tok = jnp.concatenate([fit_time(premises, tm), fit_time(hypotheses, tm)],
                          axis=0)                                 # (2B, tm)
    mask_f = (tok != 0).astype(jnp.float32)                       # (2B, tm)
    mask_tb1 = jnp.transpose(mask_f, (1, 0))[:, :, None]          # (tm, 2B, 1)

    # Time-major embedding gather: transposes the tiny int32 token matrix
    # instead of the fat embedded activation tensor.
    emb_tm = jnp.take(params["embedding"], tok.T, axis=0)         # (tm, 2B, E)

    # bidirectional LSTM encoder (premise + hypothesis fused, directions fused)
    enc_tb = bilstm_encode_tm(emb_tm, mask_tb1, params["enc"])    # (tm, 2B, 2H)
    enc = jnp.transpose(enc_tb, (1, 0, 2))                        # (2B, tm, 2H)
    enc_p, enc_h = enc[:B, :tp], enc[B:, :th]
    pmask, hmask = mask_f[:B, :tp], mask_f[B:, :th]

    # soft alignment attention
    att_p, att_h = soft_attention(enc_p, enc_h, pmask, hmask)

    # enhancement [e, a, e-a, e*a] fused with the projection Linear(8H -> H)
    proj_w_bf = params["proj_w"].astype(jnp.bfloat16)
    proj_p = enhance_and_project(enc_p, att_p, proj_w_bf, params["proj_b"])
    proj_h = enhance_and_project(enc_h, att_h, proj_w_bf, params["proj_b"])

    # composition bidirectional LSTM (fused again along batch, time-major)
    proj = jnp.concatenate([
        jnp.pad(proj_p, ((0, 0), (0, tm - tp), (0, 0))),
        jnp.pad(proj_h, ((0, 0), (0, tm - th), (0, 0))),
    ], axis=0)                                                    # (2B, tm, H) bf16
    proj_tm = jnp.transpose(proj, (1, 0, 2))                      # (tm, 2B, H)
    v_tb = bilstm_encode_tm(proj_tm, mask_tb1, params["comp"])    # (tm, 2B, 2H)
    v = jnp.transpose(v_tb, (1, 0, 2))                            # (2B, tm, 2H)

    # masked avg/max pooling + classifier head (padded tail positions carry
    # zero mask and zero LSTM output, so pooling over tm is exact).
    return pool_and_classify(v[:B], v[B:], mask_f[:B], mask_f[B:],
                             params["cls_w1"].astype(jnp.bfloat16),
                             params["cls_b1"],
                             params["cls_w2"].astype(jnp.bfloat16),
                             params["cls_b2"])


if __name__ == "__main__":
    B, T, V, E, H, L = 2, 8, 50, 32, 32, 5
    key = jax.random.PRNGKey(0)
    pkey, hkey, wkey = jax.random.split(key, 3)

    premises_lengths = jnp.array([8, 5], dtype=jnp.int32)
    hypotheses_lengths = jnp.array([6, 8], dtype=jnp.int32)

    def make_tokens(k, lengths):
        toks = jax.random.randint(k, (B, T), 1, V, dtype=jnp.int32)
        pos = jnp.arange(T)[None, :]
        return jnp.where(pos < lengths[:, None], toks, 0)

    premises = make_tokens(pkey, premises_lengths)
    hypotheses = make_tokens(hkey, hypotheses_lengths)

    params = init_params(wkey, V, E, H, L)

    out = esim_forward(params, premises, premises_lengths,
                       hypotheses, hypotheses_lengths)
    out = jax.block_until_ready(out)

    assert out.shape == (B, L), out.shape
    assert bool(jnp.all(jnp.isfinite(out)))
    print("KERNEL_OK")
</pallas_src>

<mosaic_0001>
module attributes {stable_mosaic.version = 11 : i64} {
  func.func @_input_proj_kernel(%arg0: i32, %arg1: memref<32x32xf32, #tpu.memory_space<vmem>>, %arg2: memref<32x256xbf16, #tpu.memory_space<vmem>>, %arg3: memref<1x256xf32, #tpu.memory_space<vmem>>, %arg4: memref<32x256xbf16, #tpu.memory_space<vmem>>) attributes {dimension_semantics = [#tpu.dimension_semantics<parallel>], iteration_bounds = array<i64: 1>, scalar_prefetch = 0 : i64, scratch_operands = 0 : i64, tpu.core_type = #tpu.core_type<tc>, window_params = [{transform_indices = @transform_0, window_bounds = array<i64: 32, 32>}, {pipeline_mode = #tpu.pipeline_mode<synchronous>, transform_indices = @transform_1, window_bounds = array<i64: 32, 256>}, {pipeline_mode = #tpu.pipeline_mode<synchronous>, transform_indices = @transform_2, window_bounds = array<i64: 1, 256>}, {transform_indices = @transform_3, window_bounds = array<i64: 32, 256>}]} {
    %c0 = arith.constant 0 : index
    %c0_0 = arith.constant 0 : index
    %0 = vector.load %arg1[%c0, %c0_0] : memref<32x32xf32, #tpu.memory_space<vmem>>, vector<32x32xf32>
    %1 = arith.truncf %0 : vector<32x32xf32> to vector<32x32xbf16>
    %c0_1 = arith.constant 0 : index
    %c0_2 = arith.constant 0 : index
    %2 = vector.load %arg2[%c0_1, %c0_2] : memref<32x256xbf16, #tpu.memory_space<vmem>>, vector<32x256xbf16>
    %cst = arith.constant dense<0.000000e+00> : vector<32x256xf32>
    %3 = tpu.matmul %1, %2, %cst {dimension_numbers = #tpu.dot_dimension_numbers<[1], [0], [0], [1], [0, 0, 1, 1], [], []>} : vector<32x32xbf16>, vector<32x256xbf16>, vector<32x256xf32> -> vector<32x256xf32>
    %c0_3 = arith.constant 0 : index
    %c0_4 = arith.constant 0 : index
    %4 = vector.load %arg3[%c0_3, %c0_4] : memref<1x256xf32, #tpu.memory_space<vmem>>, vector<1x256xf32>
    %5 = vector.broadcast %4 : vector<1x256xf32> to vector<32x256xf32>
    %6 = arith.addf %3, %5 : vector<32x256xf32>
    %7 = arith.truncf %6 : vector<32x256xf32> to vector<32x256xbf16>
    %c0_5 = arith.constant 0 : index
    %c0_6 = arith.constant 0 : index
    %8 = vector.load %arg4[%c0_5, %c0_6] : memref<32x256xbf16, #tpu.memory_space<vmem>>, vector<32x256xbf16>
    tpu.vector_store %arg4[%c0_5, %c0_6], %7 {strides = array<i32>} : memref<32x256xbf16, #tpu.memory_space<vmem>>, vector<32x256xbf16>,
    return
  }
  func.func @transform_0(%arg0: i32) -> (i32, i32) {
    %c0_i32 = arith.constant 0 : i32
    %c0_i32_0 = arith.constant 0 : i32
    return %arg0, %c0_i32 : i32, i32
  }
  func.func @transform_1(%arg0: i32) -> (i32, i32) {
    %c0_i32 = arith.constant 0 : i32
    %c0_i32_0 = arith.constant 0 : i32
    %c0_i32_1 = arith.constant 0 : i32
    return %c0_i32, %c0_i32_0 : i32, i32
  }
  func.func @transform_2(%arg0: i32) -> (i32, i32) {
    %c0_i32 = arith.constant 0 : i32
    %c0_i32_0 = arith.constant 0 : i32
    %c0_i32_1 = arith.constant 0 : i32
    return %c0_i32, %c0_i32_0 : i32, i32
  }
  func.func @transform_3(%arg0: i32) -> (i32, i32) {
    %c0_i32 = arith.constant 0 : i32
    %c0_i32_0 = arith.constant 0 : i32
    return %arg0, %c0_i32 : i32, i32
  }
}

</mosaic_0001>

<llo_original>
// kernel: tpu_custom_call.1
$region0: #{tpu_custom_call.1}
  #allocation0 [shape = 'u32[]', space=smem, size = 0x4, offset = 0x4, fixed_abs, tag = 'smem constant byte address 0x4 - core index']
  #allocation1 [shape = 'u32[144,128]{1,0:T(1,128)}', space=vmem, size = 0x12000, scoped, tag = 'internal scratch']
  %s0 = inlined_call_operand.hbm [shape: f32[32,32], index: 0, kind: input, shape index: {}]
  %s1 = inlined_call_operand.hbm [shape: bf16[32,256], index: 1, kind: input, shape index: {}]
  %s2 = inlined_call_operand.vmem [shape: f32[1,256], index: 2, kind: input, shape index: {}]
  %s3 = inlined_call_operand.hbm [shape: bf16[32,256], index: 3, kind: output, shape index: {}]
  %s4 = sld [smem:[#allocation0]]
  $region30: #{tpu_custom_call.1} parent=0
    _
  %s6 = ssub.s32 1, %s4
  %s7 = scalar_select 0, %s6, %s4
  $region1: #{tpu_custom_call.1} parent=0
    #allocation2 [shape = 'u8[16384]{0}', space=vmem, size = 0x4000, scoped, tag = 'input window, operand 0, single buffered']
    #allocation3 [shape = 's32[1]{0}', space=sflag, size = 0x4, scoped, tag = 'scoped memory for tpu_custom_call.1']
    #allocation4 [shape = 's32[1]{0}', space=sflag, size = 0x4, scoped, tag = 'scoped memory for tpu_custom_call.1']
    #allocation5 [shape = 'u8[16384]{0}', space=vmem, size = 0x4000, scoped, tag = 'input window, operand 1, single buffered']
    #allocation6 [shape = 's32[1]{0}', space=sflag, size = 0x4, scoped, tag = 'scoped memory for tpu_custom_call.1']
    #allocation7 [shape = 'u8[16384]{0}', space=vmem, size = 0x4000, scoped, tag = 'output window, operand 0, single buffered']
    %8 = vsyncpa [#allocation3], 0
    %9 = vsyncpa [#allocation6], 0
    %10 = vsyncpa [#allocation4], 0
    // Predicated region
    $region2: #{tpu_custom_call.1} parent=1 // pred_check
      _
    $region3: #{tpu_custom_call.1} parent=1 // pred_check_branch
      %12 = sbr.rel (0) target = $region5
    $region4: #{tpu_custom_call.1} parent=1 // pred_region
      %s14 = ssub.s32 512, 512
      %15 = vsyncadd [#allocation3], %s14
      %s16 = sshll.u32 [#allocation2], 4
      %s17 = int_to_ptr.vmem [resolvable:$true] %s16
      %22 = dma.hbm_to_vmem [thread:$0]  %s0, 512, %s17, [#allocation3], 128, 128, 8
    $region5: #{tpu_custom_call.1} parent=1 // pred_fallthru
      _
    // Predicated region
    $region6: #{tpu_custom_call.1} parent=1 // pred_check
      _
    $region7: #{tpu_custom_call.1} parent=1 // pred_check_branch
      %24 = sbr.rel (0) target = $region9
    $region8: #{tpu_custom_call.1} parent=1 // pred_region
      %s26 = ssub.s32 512, 512
      %27 = vsyncadd [#allocation6], %s26
      %s28 = sshll.u32 [#allocation5], 4
      %s29 = int_to_ptr.vmem [resolvable:$true] %s28
      %34 = dma.hbm_to_vmem [thread:$0]  %s1, 512, %s29, [#allocation6], 128, 128, 8
    $region9: #{tpu_custom_call.1} parent=1 // pred_fallthru
      _
    // Predicated region
    $region10: #{tpu_custom_call.1} parent=1 // pred_check
      _
    $region11: #{tpu_custom_call.1} parent=1 // pred_check_branch
      %36 = sbr.rel (0) target = $region13
    $region12: #{tpu_custom_call.1} parent=1 // pred_region
      _
    $region13: #{tpu_custom_call.1} parent=1 // pred_fallthru
      _
    // Predicated region
    $region14: #{tpu_custom_call.1} parent=1 // pred_check
      _
    $region15: #{tpu_custom_call.1} parent=1 // pred_check_branch
      %38 = sbr.rel (0) target = $region17
    $region16: #{tpu_custom_call.1} parent=1 // pred_region
      %39 = dma.done [#allocation3], 512
    $region17: #{tpu_custom_call.1} parent=1 // pred_fallthru
      _
    // Predicated region
    $region18: #{tpu_custom_call.1} parent=1 // pred_check
      _
    $region19: #{tpu_custom_call.1} parent=1 // pred_check_branch
      %41 = sbr.rel (0) target = $region21
    $region20: #{tpu_custom_call.1} parent=1 // pred_region
      %42 = dma.done [#allocation6], 512
    $region21: #{tpu_custom_call.1} parent=1 // pred_fallthru
      _
    %v44 = vld [vmem:[#allocation2] sm:$0xff]
    %v45 = vld [vmem:[#allocation2 + $0x8] sm:$0xff]
    %v46 = vld [vmem:[#allocation2 + $0x10] sm:$0xff]
    %v47 = vld [vmem:[#allocation2 + $0x18] sm:$0xff]
    %v48 = vpack.c.bf16 %v45, %v44
    %v49 = vpack.c.bf16 %v47, %v46
    %v50 = vld [vmem:[#allocation5] sm:$0xff]
    %v51 = vld [vmem:[#allocation5 + $0x8] sm:$0xff]
    %v52 = vld [vmem:[#allocation5 + $0x10] sm:$0xff]
    %v53 = vld [vmem:[#allocation5 + $0x18] sm:$0xff]
    %v54 = vld [vmem:[%s2] sm:$0x3]
    %v56 = vlaneseq
    %v57 = vshrl.u32 %v56, 7
    %v58 = vsub.s32 0, %v57
    %v59 = vrot.slane %v54, %v58
    %v60 = vlaneseq
    %v61 = vshrl.u32 %v60, 7
    %v62 = vsub.s32 1, %v61
    %v63 = vrot.slane %v54, %v62
    %v70 = vunpack.c.l.b16 %v50
    %v71 = vunpack.c.h.b16 %v50
    %v72 = vunpack.c.l.b16 %v51
    %v73 = vunpack.c.h.b16 %v51
    %v74 = vunpack.c.l.b16 %v52
    %v75 = vunpack.c.h.b16 %v52
    %v76 = vunpack.c.l.b16 %v53
    %v77 = vunpack.c.h.b16 %v53
    %v78 = vpack.c.b16 %v72, %v70
    %v79 = vpack.c.b16 %v73, %v71
    %v80 = vpack.c.b16 %v76, %v74
    %v81 = vpack.c.b16 %v77, %v75
    %vm86 = vcmask 261120
    %v88 = vsel %vm86, %v48, 0
    %v91 = vsel %vm86, %v49, 0
    %93 = vmatprep.subr.bf16.mxu0 %v79
    %94 = vmatpush1.bf16.msra.mxu0 %v78
    %95 = vmatprep.subr.bf16.mxu0 %v81
    %96 = vmatpush1.bf16.msra.mxu0 %v80
    %97 = vmatprep.subr.bf16.mxu0 0
    %98 = vmatpush1.bf16.msra.mxu0 0
    %99 = vmatprep.subr.bf16.mxu0 0
    %100 = vmatpush1.bf16.msra.mxu0 0
    %101 = vmatprep.subr.bf16.mxu0 0
    %102 = vmatpush1.bf16.msra.mxu0 0
    %103 = vmatprep.subr.bf16.mxu0 0
    %104 = vmatpush1.bf16.msra.mxu0 0
    %105 = vmatprep.subr.bf16.mxu0 0
    %106 = vmatpush1.bf16.msra.mxu0 0
    %107 = vmatprep.subr.bf16.mxu0 0
    %108 = vmatpush1.bf16.msra.mxu0 0
    %109 = vmatprep.subr.bf16.mxu0 0
    %110 = vmatpush1.bf16.msra.mxu0 0
    %111 = vmatprep.subr.bf16.mxu0 0
    %112 = vmatpush1.bf16.msra.mxu0 0
    %113 = vmatprep.subr.bf16.mxu0 0
    %114 = vmatpush1.bf16.msra.mxu0 0
    %115 = vmatprep.subr.bf16.mxu0 0
    %116 = vmatpush1.bf16.msra.mxu0 0
    %117 = vmatprep.subr.bf16.mxu0 0
    %118 = vmatpush1.bf16.msra.mxu0 0
    %119 = vmatprep.subr.bf16.mxu0 0
    %120 = vmatpush1.bf16.msra.mxu0 0
    %121 = vmatprep.subr.bf16.mxu0 0
    %122 = vmatpush1.bf16.msra.mxu0 0
    %123 = vmatprep.subr.bf16.mxu0 0
    %124 = vmatpush1.bf16.msra.mxu0 0
    %125 = vmatprep.mubr.bf16.mxu0 0
    %126 = vmatmul.mubr.bf16.gmra.mrb[0].mxu0 %v88
    %v127 = vpop.f32.mrb[0].mxu0
    %v128 = vadd.f32 %v59, %v127
    %v129 = vpop.f32.mrb[0].mxu0
    %v130 = vadd.f32 %v63, %v129
    %v131 = vpop.f32.mrb[0].mxu0
    %v132 = vadd.f32 %v59, %v131
    %v133 = vpop.f32.mrb[0].mxu0
    %v134 = vadd.f32 %v63, %v133
    %135 = vmatprep.mubr.bf16.mxu0 0
    %136 = vmatmul.mubr.bf16.gmra.mrb[0].mxu0 %v91
    %v137 = vpop.f32.mrb[0].mxu0
    %v138 = vadd.f32 %v59, %v137
    %v139 = vpop.f32.mrb[0].mxu0
    %v140 = vadd.f32 %v63, %v139
    %v141 = vpop.f32.mrb[0].mxu0
    %v142 = vadd.f32 %v59, %v141
    %v143 = vpop.f32.mrb[0].mxu0
    %v144 = vadd.f32 %v63, %v143
    %145 = vdwg.mxu0
    %v146 = vpack.c.bf16 %v132, %v128
    %v147 = vpack.c.bf16 %v134, %v130
    %v148 = vpack.c.bf16 %v142, %v138
    %v149 = vpack.c.bf16 %v144, %v140
    %v154 = vunpack.c.l.b16 %v146
    %v155 = vunpack.c.l.b16 %v147
    %v156 = vunpack.c.h.b16 %v146
    %v157 = vunpack.c.h.b16 %v147
    %v158 = vunpack.c.l.b16 %v148
    %v159 = vunpack.c.l.b16 %v149
    %v160 = vunpack.c.h.b16 %v148
    %v161 = vunpack.c.h.b16 %v149
    %v162 = vpack.c.b16 %v155, %v154
    %v163 = vpack.c.b16 %v157, %v156
    %v164 = vpack.c.b16 %v159, %v158
    %v165 = vpack.c.b16 %v161, %v160
    %170 = vst [vmem:[#allocation7] sm:$0xff] %v162
    %171 = vst [vmem:[#allocation7 + $0x8] sm:$0xff] %v163
    %172 = vst [vmem:[#allocation7 + $0x10] sm:$0xff] %v164
    %173 = vst [vmem:[#allocation7 + $0x18] sm:$0xff] %v165
    // Predicated region
    $region22: #{tpu_custom_call.1} parent=1 // pred_check
      _
    $region23: #{tpu_custom_call.1} parent=1 // pred_check_branch
      %175 = sbr.rel (0) target = $region25
    $region24: #{tpu_custom_call.1} parent=1 // pred_region
      %s177 = ssub.s32 512, 512
      %178 = vsyncadd [#allocation4], %s177
      %s179 = sshll.u32 [#allocation7], 4
      %s180 = int_to_ptr.vmem [resolvable:$true] %s179
      %185 = dma.vmem_to_hbm [thread:$0]  %s180, 512, %s3, [#allocation4], 128, 128, 8
    $region25: #{tpu_custom_call.1} parent=1 // pred_fallthru
      _
    // Predicated region
    $region26: #{tpu_custom_call.1} parent=1 // pred_check
      _
    $region27: #{tpu_custom_call.1} parent=1 // pred_check_branch
      %187 = sbr.rel (0) target = $region29
    $region28: #{tpu_custom_call.1} parent=1 // pred_region
      %188 = dma.done [#allocation4], 512
    $region29: #{tpu_custom_call.1} parent=1 // pred_fallthru
      _
    %189 = vsyncpa [#allocation3], 1
    %190 = vsyncpa [#allocation6], 1
    %191 = vsyncpa [#allocation4], 1

</llo_original>
